<compile_context>
chip_gen: v7x
topology: tpu7x:2x2x1
jax: 0.10.0
libtpu: 0.0.40
codegen_flags: <defaults>
</compile_context>

<pallas_src>
import functools

import jax
import jax.numpy as jnp
from jax.experimental import pallas as pl
from jax.experimental.pallas import tpu as pltpu

BN_EPS = 1e-5
LANE = 128
SUBLANE = 8
DEFAULT_BATCH_TILE = 2048   # amortize ~0.35us/step overhead, feed the MXU long
MIN_GRID_STEPS = 2          # v7x has 2 TensorCores; give both work when B allows


def _cdiv(a, b):
    return (a + b - 1) // b


def _round_up(x, m):
    return _cdiv(x, m) * m


def _choose_batch_tile(B, batch_tile):
    """Pick (tb, b_pad) so that (a) grid >= MIN_GRID_STEPS whenever the batch
    has enough rows (v7x megacore), (b) tb <= batch_tile, and (c) rows are
    split evenly across steps so ragged batches pad by < one tile."""
    rows = _round_up(B, SUBLANE)
    steps = max(_cdiv(rows, batch_tile), min(MIN_GRID_STEPS, rows // SUBLANE))
    tb = _round_up(_cdiv(rows, steps), SUBLANE)
    b_pad = tb * _cdiv(rows, tb)
    return tb, b_pad


# ---------------------------------------------------------------------------
# Kernel: whole (BN-folded) MLP forward for one batch tile.
# refs = (x, w1, b1, w2, b2, w3, b3, w4, b4, out)
# ---------------------------------------------------------------------------
def asd_mlp_kernel(n_out, act_dtype, x_ref, *refs):
    out_ref = refs[-1]
    wb_refs = refs[:-1]
    n_layers = len(wb_refs) // 2

    h = x_ref[...]                                   # (TB, din) f32
    for li in range(n_layers):
        w = wb_refs[2 * li][...]                     # (din, dout), bf16 (or f32)
        b = wb_refs[2 * li + 1][...]                 # (1, dout), f32 (BN folded)
        acc = jnp.dot(h.astype(w.dtype), w,
                      preferred_element_type=jnp.float32) + b   # f32 accumulate
        if li < n_layers - 1:
            # ReLU (Dropout = identity in eval mode); keep intermediates in
            # act_dtype (bf16 on v6e/v7x) to halve vst/vld pressure.
            h = jnp.maximum(acc, 0.0).astype(act_dtype)
        else:
            h = acc                                  # logits stay f32
    # Head weights are lane-padded for the matmul; store only the real logits
    # (cheap masked vst) instead of a 128-lane-padded f32 slab to HBM.
    out_ref[...] = h[:, :n_out]


# ---------------------------------------------------------------------------
# Host-side parameter prep: BN folding + head lane padding.
# ---------------------------------------------------------------------------
def _fold_bn(w, b, gamma, beta, rmean, rvar):
    """Fold eval-mode BatchNorm1d into the preceding Linear."""
    scale = gamma * jax.lax.rsqrt(rvar + BN_EPS)          # (dout,)
    w_f = w * scale[None, :]                              # per-output-column
    b_f = (b - rmean) * scale + beta
    return w_f, b_f


def asd_tabular_forward(x, layers, num_outputs, *,
                        weight_dtype=jnp.bfloat16,
                        activation_dtype=None,
                        batch_tile=DEFAULT_BATCH_TILE):
    """layers = [(w, b, gamma, beta, rmean, rvar)] * n_hidden + [(w, b)];
    all linear weights are (in_dim, out_dim)."""
    B, din = x.shape
    n_pad = _round_up(num_outputs, LANE)
    tb, b_pad = _choose_batch_tile(B, batch_tile)

    if activation_dtype is None:
        # v5e has no bf16 VPU/EUP datapath -> keep elementwise math in f32 there.
        try:
            is_v5 = "v5" in jax.devices()[0].device_kind.lower()
        except Exception:  # pragma: no cover - defensive
            is_v5 = False
        if is_v5 or jnp.dtype(weight_dtype) == jnp.dtype(jnp.float32):
            activation_dtype = jnp.float32
        else:
            activation_dtype = jnp.bfloat16

    # Fold BN into the hidden Linears (host side, once).
    folded = [_fold_bn(*layer) for layer in layers[:-1]] + [layers[-1]]

    # Pad only the output head to a lane-dense width for the in-VMEM matmul;
    # the HBM store is sliced back to num_outputs inside the kernel.
    w_out, b_out = folded[-1]
    folded[-1] = (jnp.pad(w_out, ((0, 0), (0, n_pad - num_outputs))),
                  jnp.pad(b_out, ((0, n_pad - num_outputs),)))

    flat = []
    for w, b in folded:
        flat.append(w.astype(weight_dtype))                 # matmul operand dtype
        flat.append(b.reshape(1, -1).astype(jnp.float32))   # bias stays f32

    # Only the batch dim is padded; feature dim stays = din (full-dim block).
    x_pad = jnp.pad(x.astype(jnp.float32), ((0, b_pad - B), (0, 0)))

    # Advisory cost estimate so XLA schedules the custom call sensibly.
    weights = flat[0::2]
    flops = 2 * b_pad * sum(int(w.shape[0]) * int(w.shape[1]) for w in weights)
    bytes_accessed = (int(x_pad.size) * 4 + b_pad * num_outputs * 4
                      + sum(int(p.size) * p.dtype.itemsize for p in flat))
    cost = pl.CostEstimate(flops=flops, transcendentals=0,
                           bytes_accessed=bytes_accessed)

    grid = (b_pad // tb,)
    in_specs = [pl.BlockSpec((tb, din), lambda i: (i, 0))]           # x: pipelined
    for p in flat:                                                   # weights: resident
        in_specs.append(pl.BlockSpec(p.shape, lambda i: (0, 0)))
    out_spec = pl.BlockSpec((tb, num_outputs), lambda i: (i, 0))     # no lane padding

    kernel = functools.partial(asd_mlp_kernel, num_outputs, activation_dtype)

    out = pl.pallas_call(
        kernel,
        out_shape=jax.ShapeDtypeStruct((b_pad, num_outputs), jnp.float32),
        grid=grid,
        in_specs=in_specs,
        out_specs=out_spec,
        compiler_params=pltpu.CompilerParams(
            dimension_semantics=("parallel",),        # v7x: shard batch over 2 TCs
            vmem_limit_bytes=32 * 1024 * 1024),       # portable v5e/v6e/v7x; usage ~ a few MiB
        cost_estimate=cost,
    )(x_pad, *flat)

    return out[:B, :]


# ---------------------------------------------------------------------------
# Parameter init mirroring _initialize_weights() (xavier_normal_, zero bias).
# BN affine / running stats use non-trivial values so the host-side BN fold is
# actually exercised (module init would fold trivially).
# ---------------------------------------------------------------------------
def init_params(key, input_dim, hidden_layers, num_classes, task_type):
    dims = [input_dim] + list(hidden_layers)
    out_dim = num_classes if task_type == "classification" else 1
    keys = jax.random.split(key, 2 * (len(hidden_layers) + 1))
    layers = []
    ki = 0
    for din, dout in zip(dims[:-1], dims[1:]):
        std = (2.0 / (din + dout)) ** 0.5
        w = jax.random.normal(keys[ki], (din, dout), jnp.float32) * std
        ki += 1
        b = jnp.zeros((dout,), jnp.float32)
        kg, kb, km, kv = jax.random.split(keys[ki], 4)
        ki += 1
        gamma = 1.0 + 0.1 * jax.random.normal(kg, (dout,), jnp.float32)
        beta = 0.1 * jax.random.normal(kb, (dout,), jnp.float32)
        rmean = 0.1 * jax.random.normal(km, (dout,), jnp.float32)
        rvar = jax.random.uniform(kv, (dout,), jnp.float32, minval=0.5, maxval=1.5)
        layers.append((w, b, gamma, beta, rmean, rvar))
    din = dims[-1]
    std = (2.0 / (din + out_dim)) ** 0.5
    w = jax.random.normal(keys[ki], (din, out_dim), jnp.float32) * std
    b = jnp.zeros((out_dim,), jnp.float32)
    layers.append((w, b))
    return layers, out_dim


def reference_forward(x, layers):
    """Pure-JAX reference: unfolded Linear -> BN(eval) -> ReLU chain + head."""
    h = x
    for (w, b, g, be, rm, rv) in layers[:-1]:
        h = h @ w + b
        h = (h - rm) / jnp.sqrt(rv + BN_EPS) * g + be
        h = jnp.maximum(h, 0.0)
    w, b = layers[-1]
    return h @ w + b


if __name__ == "__main__":
    # Module defaults: task_type='classification', input_dim=32, num_classes=2,
    # hidden_layers=[512, 256, 128].
    batch = 8
    input_dim = 32
    hidden_layers = [512, 256, 128]
    num_classes = 2
    task_type = "classification"

    key = jax.random.PRNGKey(0)
    k_x, k_p, k_x2 = jax.random.split(key, 3)

    layers, out_dim = init_params(k_p, input_dim, hidden_layers, num_classes,
                                  task_type)

    # --- small-batch run, exact f32 path (tight tolerance) ---
    x = jax.random.normal(k_x, (batch, input_dim), jnp.float32)
    out = jax.block_until_ready(
        asd_tabular_forward(x, layers, out_dim,
                            weight_dtype=jnp.float32,
                            activation_dtype=jnp.float32))
    ref = reference_forward(x, layers)
    assert out.shape == (batch, out_dim)
    assert jnp.allclose(out, ref, atol=1e-3, rtol=1e-3), "f32 mismatch vs reference"

    # --- multi-tile run (grid > 1, ragged batch), default bf16 fast path ---
    big_batch = 1032   # not a multiple of the tile -> exercises padding logic
    xb = jax.random.normal(k_x2, (big_batch, input_dim), jnp.float32)
    out_b = jax.block_until_ready(
        asd_tabular_forward(xb, layers, out_dim, batch_tile=512))
    ref_b = reference_forward(xb, layers)
    assert out_b.shape == (big_batch, out_dim)
    assert jnp.allclose(out_b, ref_b, atol=5e-2, rtol=5e-2), \
        "bf16 mismatch vs reference"

    # --- default-tile large-batch run (grid split for v7x megacore) ---
    out_c = jax.block_until_ready(asd_tabular_forward(xb, layers, out_dim))
    assert jnp.allclose(out_c, ref_b, atol=5e-2, rtol=5e-2), \
        "bf16 (default tile) mismatch vs reference"

    print("KERNEL_OK")
</pallas_src>

<mosaic_0001>
module attributes {stable_mosaic.version = 11 : i64} {
  func.func @asd_mlp_kernel(%arg0: i32, %arg1: memref<8x32xf32, #tpu.memory_space<vmem>>, %arg2: memref<32x512xf32, #tpu.memory_space<vmem>>, %arg3: memref<1x512xf32, #tpu.memory_space<vmem>>, %arg4: memref<512x256xf32, #tpu.memory_space<vmem>>, %arg5: memref<1x256xf32, #tpu.memory_space<vmem>>, %arg6: memref<256x128xf32, #tpu.memory_space<vmem>>, %arg7: memref<1x128xf32, #tpu.memory_space<vmem>>, %arg8: memref<128x128xf32, #tpu.memory_space<vmem>>, %arg9: memref<1x128xf32, #tpu.memory_space<vmem>>, %arg10: memref<8x2xf32, #tpu.memory_space<vmem>>) attributes {dimension_semantics = [#tpu.dimension_semantics<parallel>], iteration_bounds = array<i64: 1>, scalar_prefetch = 0 : i64, scratch_operands = 0 : i64, tpu.core_type = #tpu.core_type<tc>, window_params = [{transform_indices = @transform_0, window_bounds = array<i64: 8, 32>}, {pipeline_mode = #tpu.pipeline_mode<synchronous>, transform_indices = @transform_1, window_bounds = array<i64: 32, 512>}, {pipeline_mode = #tpu.pipeline_mode<synchronous>, transform_indices = @transform_2, window_bounds = array<i64: 1, 512>}, {pipeline_mode = #tpu.pipeline_mode<synchronous>, transform_indices = @transform_3, window_bounds = array<i64: 512, 256>}, {pipeline_mode = #tpu.pipeline_mode<synchronous>, transform_indices = @transform_4, window_bounds = array<i64: 1, 256>}, {pipeline_mode = #tpu.pipeline_mode<synchronous>, transform_indices = @transform_5, window_bounds = array<i64: 256, 128>}, {pipeline_mode = #tpu.pipeline_mode<synchronous>, transform_indices = @transform_6, window_bounds = array<i64: 1, 128>}, {pipeline_mode = #tpu.pipeline_mode<synchronous>, transform_indices = @transform_7, window_bounds = array<i64: 128, 128>}, {pipeline_mode = #tpu.pipeline_mode<synchronous>, transform_indices = @transform_8, window_bounds = array<i64: 1, 128>}, {transform_indices = @transform_9, window_bounds = array<i64: 8, 2>}]} {
    %c0 = arith.constant 0 : index
    %c0_0 = arith.constant 0 : index
    %0 = vector.load %arg1[%c0, %c0_0] : memref<8x32xf32, #tpu.memory_space<vmem>>, vector<8x32xf32>
    %c0_1 = arith.constant 0 : index
    %c0_2 = arith.constant 0 : index
    %1 = vector.load %arg2[%c0_1, %c0_2] : memref<32x512xf32, #tpu.memory_space<vmem>>, vector<32x512xf32>
    %c0_3 = arith.constant 0 : index
    %c0_4 = arith.constant 0 : index
    %2 = vector.load %arg3[%c0_3, %c0_4] : memref<1x512xf32, #tpu.memory_space<vmem>>, vector<1x512xf32>
    %cst = arith.constant dense<0.000000e+00> : vector<8x512xf32>
    %3 = tpu.matmul %0, %1, %cst {dimension_numbers = #tpu.dot_dimension_numbers<[1], [0], [0], [1], [0, 0, 1, 1], [], []>} : vector<8x32xf32>, vector<32x512xf32>, vector<8x512xf32> -> vector<8x512xf32>
    %4 = vector.broadcast %2 : vector<1x512xf32> to vector<8x512xf32>
    %5 = arith.addf %3, %4 : vector<8x512xf32>
    %cst_5 = arith.constant 0.000000e+00 : f32
    %6 = vector.broadcast %cst_5 : f32 to vector<8x512xf32>
    %7 = arith.maximumf %5, %6 : vector<8x512xf32>
    %c0_6 = arith.constant 0 : index
    %c0_7 = arith.constant 0 : index
    %8 = vector.load %arg4[%c0_6, %c0_7] : memref<512x256xf32, #tpu.memory_space<vmem>>, vector<512x256xf32>
    %c0_8 = arith.constant 0 : index
    %c0_9 = arith.constant 0 : index
    %9 = vector.load %arg5[%c0_8, %c0_9] : memref<1x256xf32, #tpu.memory_space<vmem>>, vector<1x256xf32>
    %cst_10 = arith.constant dense<0.000000e+00> : vector<8x256xf32>
    %10 = tpu.matmul %7, %8, %cst_10 {dimension_numbers = #tpu.dot_dimension_numbers<[1], [0], [0], [1], [0, 0, 1, 1], [], []>} : vector<8x512xf32>, vector<512x256xf32>, vector<8x256xf32> -> vector<8x256xf32>
    %11 = vector.broadcast %9 : vector<1x256xf32> to vector<8x256xf32>
    %12 = arith.addf %10, %11 : vector<8x256xf32>
    %cst_11 = arith.constant 0.000000e+00 : f32
    %13 = vector.broadcast %cst_11 : f32 to vector<8x256xf32>
    %14 = arith.maximumf %12, %13 : vector<8x256xf32>
    %c0_12 = arith.constant 0 : index
    %c0_13 = arith.constant 0 : index
    %15 = vector.load %arg6[%c0_12, %c0_13] : memref<256x128xf32, #tpu.memory_space<vmem>>, vector<256x128xf32>
    %c0_14 = arith.constant 0 : index
    %c0_15 = arith.constant 0 : index
    %16 = vector.load %arg7[%c0_14, %c0_15] : memref<1x128xf32, #tpu.memory_space<vmem>>, vector<1x128xf32>
    %cst_16 = arith.constant dense<0.000000e+00> : vector<8x128xf32>
    %17 = tpu.matmul %14, %15, %cst_16 {dimension_numbers = #tpu.dot_dimension_numbers<[1], [0], [0], [1], [0, 0, 1, 1], [], []>} : vector<8x256xf32>, vector<256x128xf32>, vector<8x128xf32> -> vector<8x128xf32>
    %18 = vector.broadcast %16 : vector<1x128xf32> to vector<8x128xf32>
    %19 = arith.addf %17, %18 : vector<8x128xf32>
    %cst_17 = arith.constant 0.000000e+00 : f32
    %20 = vector.broadcast %cst_17 : f32 to vector<8x128xf32>
    %21 = arith.maximumf %19, %20 : vector<8x128xf32>
    %c0_18 = arith.constant 0 : index
    %c0_19 = arith.constant 0 : index
    %22 = vector.load %arg8[%c0_18, %c0_19] : memref<128x128xf32, #tpu.memory_space<vmem>>, vector<128x128xf32>
    %c0_20 = arith.constant 0 : index
    %c0_21 = arith.constant 0 : index
    %23 = vector.load %arg9[%c0_20, %c0_21] : memref<1x128xf32, #tpu.memory_space<vmem>>, vector<1x128xf32>
    %cst_22 = arith.constant dense<0.000000e+00> : vector<8x128xf32>
    %24 = tpu.matmul %21, %22, %cst_22 {dimension_numbers = #tpu.dot_dimension_numbers<[1], [0], [0], [1], [0, 0, 1, 1], [], []>} : vector<8x128xf32>, vector<128x128xf32>, vector<8x128xf32> -> vector<8x128xf32>
    %25 = vector.broadcast %23 : vector<1x128xf32> to vector<8x128xf32>
    %26 = arith.addf %24, %25 : vector<8x128xf32>
    %27 = vector.extract_strided_slice %26 {offsets = [0, 0], sizes = [8, 2], strides = [1, 1]} : vector<8x128xf32> to vector<8x2xf32>
    %c0_23 = arith.constant 0 : index
    %c0_24 = arith.constant 0 : index
    %28 = vector.load %arg10[%c0_23, %c0_24] : memref<8x2xf32, #tpu.memory_space<vmem>>, vector<8x2xf32>
    tpu.vector_store %arg10[%c0_23, %c0_24], %27 {strides = array<i32>} : memref<8x2xf32, #tpu.memory_space<vmem>>, vector<8x2xf32>,
    return
  }
  func.func @transform_0(%arg0: i32) -> (i32, i32) {
    %c0_i32 = arith.constant 0 : i32
    %c0_i32_0 = arith.constant 0 : i32
    return %arg0, %c0_i32 : i32, i32
  }
  func.func @transform_1(%arg0: i32) -> (i32, i32) {
    %c0_i32 = arith.constant 0 : i32
    %c0_i32_0 = arith.constant 0 : i32
    %c0_i32_1 = arith.constant 0 : i32
    return %c0_i32, %c0_i32_0 : i32, i32
  }
  func.func @transform_2(%arg0: i32) -> (i32, i32) {
    %c0_i32 = arith.constant 0 : i32
    %c0_i32_0 = arith.constant 0 : i32
    %c0_i32_1 = arith.constant 0 : i32
    return %c0_i32, %c0_i32_0 : i32, i32
  }
  func.func @transform_3(%arg0: i32) -> (i32, i32) {
    %c0_i32 = arith.constant 0 : i32
    %c0_i32_0 = arith.constant 0 : i32
    %c0_i32_1 = arith.constant 0 : i32
    return %c0_i32, %c0_i32_0 : i32, i32
  }
  func.func @transform_4(%arg0: i32) -> (i32, i32) {
    %c0_i32 = arith.constant 0 : i32
    %c0_i32_0 = arith.constant 0 : i32
    %c0_i32_1 = arith.constant 0 : i32
    return %c0_i32, %c0_i32_0 : i32, i32
  }
  func.func @transform_5(%arg0: i32) -> (i32, i32) {
    %c0_i32 = arith.constant 0 : i32
    %c0_i32_0 = arith.constant 0 : i32
    %c0_i32_1 = arith.constant 0 : i32
    return %c0_i32, %c0_i32_0 : i32, i32
  }
  func.func @transform_6(%arg0: i32) -> (i32, i32) {
    %c0_i32 = arith.constant 0 : i32
    %c0_i32_0 = arith.constant 0 : i32
    %c0_i32_1 = arith.constant 0 : i32
    return %c0_i32, %c0_i32_0 : i32, i32
  }
  func.func @transform_7(%arg0: i32) -> (i32, i32) {
    %c0_i32 = arith.constant 0 : i32
    %c0_i32_0 = arith.constant 0 : i32
    %c0_i32_1 = arith.constant 0 : i32
    return %c0_i32, %c0_i32_0 : i32, i32
  }
  func.func @transform_8(%arg0: i32) -> (i32, i32) {
    %c0_i32 = arith.constant 0 : i32
    %c0_i32_0 = arith.constant 0 : i32
    %c0_i32_1 = arith.constant 0 : i32
    return %c0_i32, %c0_i32_0 : i32, i32
  }
  func.func @transform_9(%arg0: i32) -> (i32, i32) {
    %c0_i32 = arith.constant 0 : i32
    %c0_i32_0 = arith.constant 0 : i32
    return %arg0, %c0_i32 : i32, i32
  }
}

</mosaic_0001>

<llo_original>
// kernel: tpu_custom_call.1
$region0: #{tpu_custom_call.1}
  #allocation0 [shape = 'u32[]', space=smem, size = 0x4, offset = 0x4, fixed_abs, tag = 'smem constant byte address 0x4 - core index']
  #allocation1 [shape = 'u32[144,128]{1,0:T(1,128)}', space=vmem, size = 0x12000, scoped, tag = 'internal scratch']
  %s0 = inlined_call_operand.hbm [shape: f32[8,32], index: 0, kind: input, shape index: {}]
  %s1 = inlined_call_operand.hbm [shape: f32[32,512], index: 1, kind: input, shape index: {}]
  %s2 = inlined_call_operand.vmem [shape: f32[1,512], index: 2, kind: input, shape index: {}]
  %s3 = inlined_call_operand.hbm [shape: f32[512,256], index: 3, kind: input, shape index: {}]
  %s4 = inlined_call_operand.vmem [shape: f32[1,256], index: 4, kind: input, shape index: {}]
  %s5 = inlined_call_operand.hbm [shape: f32[256,128], index: 5, kind: input, shape index: {}]
  %s6 = inlined_call_operand.vmem [shape: f32[1,128], index: 6, kind: input, shape index: {}]
  %s7 = inlined_call_operand.hbm [shape: f32[128,128], index: 7, kind: input, shape index: {}]
  %s8 = inlined_call_operand.vmem [shape: f32[1,128], index: 8, kind: input, shape index: {}]
  %s9 = inlined_call_operand.vmem [shape: f32[8,2], index: 9, kind: output, shape index: {}]
  %s10 = sld [smem:[#allocation0]]
  $region66: #{tpu_custom_call.1} parent=0
    _
  %s12 = ssub.s32 1, %s10
  %s13 = scalar_select 0, %s12, %s10
  $region1: #{tpu_custom_call.1} parent=0
    #allocation2 [shape = 'u8[4096]{0}', space=vmem, size = 0x1000, scoped, tag = 'input window, operand 0, single buffered']
    #allocation3 [shape = 's32[1]{0}', space=sflag, size = 0x4, scoped, tag = 'scoped memory for tpu_custom_call.1']
    #allocation4 [shape = 'u8[65536]{0}', space=vmem, size = 0x10000, scoped, tag = 'input window, operand 1, single buffered']
    #allocation5 [shape = 's32[1]{0}', space=sflag, size = 0x4, scoped, tag = 'scoped memory for tpu_custom_call.1']
    #allocation6 [shape = 'u8[524288]{0}', space=vmem, size = 0x80000, scoped, tag = 'input window, operand 3, single buffered']
    #allocation7 [shape = 'u8[131072]{0}', space=vmem, size = 0x20000, scoped, tag = 'input window, operand 5, single buffered']
    #allocation8 [shape = 's32[1]{0}', space=sflag, size = 0x4, scoped, tag = 'scoped memory for tpu_custom_call.1']
    #allocation9 [shape = 'u8[65536]{0}', space=vmem, size = 0x10000, scoped, tag = 'input window, operand 7, single buffered']
    %14 = vsyncpa [#allocation3], 0
    %15 = vsyncpa [#allocation5], 0
    %16 = vsyncpa [#allocation8], 0
    // Predicated region
    $region2: #{tpu_custom_call.1} parent=1 // pred_check
      _
    $region3: #{tpu_custom_call.1} parent=1 // pred_check_branch
      %18 = sbr.rel (0) target = $region5
    $region4: #{tpu_custom_call.1} parent=1 // pred_region
      %s20 = ssub.s32 128, 128
      %21 = vsyncadd [#allocation3], %s20
      %s23 = sshll.u32 [#allocation2], 4
      %s24 = int_to_ptr.vmem [resolvable:$true] %s23
      %26 = dma.hbm_to_vmem [thread:$0]  %s0, 128, %s24, [#allocation3]
    $region5: #{tpu_custom_call.1} parent=1 // pred_fallthru
      _
    // Predicated region
    $region6: #{tpu_custom_call.1} parent=1 // pred_check
      _
    $region7: #{tpu_custom_call.1} parent=1 // pred_check_branch
      %28 = sbr.rel (0) target = $region9
    $region8: #{tpu_custom_call.1} parent=1 // pred_region
      %s30 = ssub.s32 2048, 2048
      %31 = vsyncadd [#allocation5], %s30
      %s32 = sshll.u32 [#allocation4], 4
      %s33 = int_to_ptr.vmem [resolvable:$true] %s32
      %38 = dma.hbm_to_vmem [thread:$0]  %s1, 2048, %s33, [#allocation5], 512, 512, 32
    $region9: #{tpu_custom_call.1} parent=1 // pred_fallthru
      _
    // Predicated region
    $region10: #{tpu_custom_call.1} parent=1 // pred_check
      _
    $region11: #{tpu_custom_call.1} parent=1 // pred_check_branch
      %40 = sbr.rel (0) target = $region13
    $region12: #{tpu_custom_call.1} parent=1 // pred_region
      _
    $region13: #{tpu_custom_call.1} parent=1 // pred_fallthru
      _
    // Predicated region
    $region14: #{tpu_custom_call.1} parent=1 // pred_check
      _
    $region15: #{tpu_custom_call.1} parent=1 // pred_check_branch
      %42 = sbr.rel (0) target = $region17
    $region16: #{tpu_custom_call.1} parent=1 // pred_region
      %s44 = ssub.s32 16384, 16384
      %45 = vsyncadd [#allocation5], %s44
      %s46 = sshll.u32 [#allocation6], 4
      %s47 = int_to_ptr.vmem [resolvable:$true] %s46
      %52 = dma.hbm_to_vmem [thread:$0]  %s3, 16384, %s47, [#allocation5], 256, 256, 16
    $region17: #{tpu_custom_call.1} parent=1 // pred_fallthru
      _
    // Predicated region
    $region18: #{tpu_custom_call.1} parent=1 // pred_check
      _
    $region19: #{tpu_custom_call.1} parent=1 // pred_check_branch
      %54 = sbr.rel (0) target = $region21
    $region20: #{tpu_custom_call.1} parent=1 // pred_region
      _
    $region21: #{tpu_custom_call.1} parent=1 // pred_fallthru
      _
    // Predicated region
    $region22: #{tpu_custom_call.1} parent=1 // pred_check
      _
    $region23: #{tpu_custom_call.1} parent=1 // pred_check_branch
      %56 = sbr.rel (0) target = $region25
    $region24: #{tpu_custom_call.1} parent=1 // pred_region
      %s58 = ssub.s32 4096, 4096
      %59 = vsyncadd [#allocation8], %s58
      %s60 = sshll.u32 [#allocation7], 4
      %s61 = int_to_ptr.vmem [resolvable:$true] %s60
      %66 = dma.hbm_to_vmem [thread:$0]  %s5, 4096, %s61, [#allocation8], 128, 128, 8
    $region25: #{tpu_custom_call.1} parent=1 // pred_fallthru
      _
    // Predicated region
    $region26: #{tpu_custom_call.1} parent=1 // pred_check
      _
    $region27: #{tpu_custom_call.1} parent=1 // pred_check_branch
      %68 = sbr.rel (0) target = $region29
    $region28: #{tpu_custom_call.1} parent=1 // pred_region
      _
    $region29: #{tpu_custom_call.1} parent=1 // pred_fallthru
      _
    // Predicated region
    $region30: #{tpu_custom_call.1} parent=1 // pred_check
      _
    $region31: #{tpu_custom_call.1} parent=1 // pred_check_branch
      %70 = sbr.rel (0) target = $region33
    $region32: #{tpu_custom_call.1} parent=1 // pred_region
      %s72 = ssub.s32 2048, 2048
      %73 = vsyncadd [#allocation8], %s72
      %s74 = sshll.u32 [#allocation9], 4
      %s75 = int_to_ptr.vmem [resolvable:$true] %s74
      %80 = dma.hbm_to_vmem [thread:$0]  %s7, 2048, %s75, [#allocation8], 128, 128, 8
    $region33: #{tpu_custom_call.1} parent=1 // pred_fallthru
      _
    // Predicated region
    $region34: #{tpu_custom_call.1} parent=1 // pred_check
      _
    $region35: #{tpu_custom_call.1} parent=1 // pred_check_branch
      %82 = sbr.rel (0) target = $region37
    $region36: #{tpu_custom_call.1} parent=1 // pred_region
      _
    $region37: #{tpu_custom_call.1} parent=1 // pred_fallthru
      _
    // Predicated region
    $region38: #{tpu_custom_call.1} parent=1 // pred_check
      _
    $region39: #{tpu_custom_call.1} parent=1 // pred_check_branch
      %84 = sbr.rel (0) target = $region41
    $region40: #{tpu_custom_call.1} parent=1 // pred_region
      %85 = dma.done [#allocation3], 128
    $region41: #{tpu_custom_call.1} parent=1 // pred_fallthru
      _
    // Predicated region
    $region42: #{tpu_custom_call.1} parent=1 // pred_check
      _
    $region43: #{tpu_custom_call.1} parent=1 // pred_check_branch
      %87 = sbr.rel (0) target = $region45
    $region44: #{tpu_custom_call.1} parent=1 // pred_region
      %88 = dma.done [#allocation5], 2048
    $region45: #{tpu_custom_call.1} parent=1 // pred_fallthru
      _
    // Predicated region
    $region46: #{tpu_custom_call.1} parent=1 // pred_check
      _
    $region47: #{tpu_custom_call.1} parent=1 // pred_check_branch
      %90 = sbr.rel (0) target = $region49
    $region48: #{tpu_custom_call.1} parent=1 // pred_region
      %91 = dma.done [#allocation5], 16384
    $region49: #{tpu_custom_call.1} parent=1 // pred_fallthru
      _
    // Predicated region
    $region50: #{tpu_custom_call.1} parent=1 // pred_check
      _
    $region51: #{tpu_custom_call.1} parent=1 // pred_check_branch
      %93 = sbr.rel (0) target = $region53
    $region52: #{tpu_custom_call.1} parent=1 // pred_region
      %94 = dma.done [#allocation8], 4096
    $region53: #{tpu_custom_call.1} parent=1 // pred_fallthru
      _
    // Predicated region
    $region54: #{tpu_custom_call.1} parent=1 // pred_check
      _
    $region55: #{tpu_custom_call.1} parent=1 // pred_check_branch
      %96 = sbr.rel (0) target = $region57
    $region56: #{tpu_custom_call.1} parent=1 // pred_region
      %97 = dma.done [#allocation8], 2048
    $region57: #{tpu_custom_call.1} parent=1 // pred_fallthru
      _
    %v98 = vld [vmem:[#allocation2] sm:$0xff]
    %v99 = vld [vmem:[#allocation4] sm:$0xff]
    %v100 = vld [vmem:[#allocation4 + $0x8] sm:$0xff]
    %v101 = vld [vmem:[#allocation4 + $0x10] sm:$0xff]
    %v102 = vld [vmem:[#allocation4 + $0x18] sm:$0xff]
    %v103 = vld [vmem:[#allocation4 + $0x20] sm:$0xff]
    %v104 = vld [vmem:[#allocation4 + $0x28] sm:$0xff]
    %v105 = vld [vmem:[#allocation4 + $0x30] sm:$0xff]
    %v106 = vld [vmem:[#allocation4 + $0x38] sm:$0xff]
    %v107 = vld [vmem:[#allocation4 + $0x40] sm:$0xff]
    %v108 = vld [vmem:[#allocation4 + $0x48] sm:$0xff]
    %v109 = vld [vmem:[#allocation4 + $0x50] sm:$0xff]
    %v110 = vld [vmem:[#allocation4 + $0x58] sm:$0xff]
    %v111 = vld [vmem:[#allocation4 + $0x60] sm:$0xff]
    %v112 = vld [vmem:[#allocation4 + $0x68] sm:$0xff]
    %v113 = vld [vmem:[#allocation4 + $0x70] sm:$0xff]
    %v114 = vld [vmem:[#allocation4 + $0x78] sm:$0xff]
    %v115 = vld [vmem:[%s2] sm:$0xf]
    %v117 = vlaneseq
    %v118 = vshrl.u32 %v117, 7
    %v119 = vsub.s32 0, %v118
    %v120 = vrot.slane %v115, %v119
    %v121 = vlaneseq
    %v122 = vshrl.u32 %v121, 7
    %v123 = vsub.s32 1, %v122
    %v124 = vrot.slane %v115, %v123
    %v125 = vlaneseq
    %v126 = vshrl.u32 %v125, 7
    %v127 = vsub.s32 2, %v126
    %v128 = vrot.slane %v115, %v127
    %v129 = vlaneseq
    %v130 = vshrl.u32 %v129, 7
    %v131 = vsub.s32 3, %v130
    %v132 = vrot.slane %v115, %v131
    %vm137 = vcmask 261120
    %v139 = vsel %vm137, %v98, 0
    %141 = vmatprep.subr.mxu0 %v100
    %142 = vmatpush1.msra.mxu0 %v99
    %143 = vmatprep.subr.mxu0 %v104
    %144 = vmatpush1.msra.mxu0 %v103
    %145 = vmatprep.subr.mxu0 %v108
    %146 = vmatpush1.msra.mxu0 %v107
    %147 = vmatprep.subr.mxu0 %v112
    %148 = vmatpush1.msra.mxu0 %v111
    %149 = vmatprep.subr.mxu0 0.0
    %150 = vmatpush1.msra.mxu0 0.0
    %151 = vmatprep.subr.mxu0 0.0
    %152 = vmatpush1.msra.mxu0 0.0
    %153 = vmatprep.subr.mxu0 0.0
    %154 = vmatpush1.msra.mxu0 0.0
    %155 = vmatprep.subr.mxu0 0.0
    %156 = vmatpush1.msra.mxu0 0.0
    %157 = vmatprep.subr.mxu0 0.0
    %158 = vmatpush1.msra.mxu0 0.0
    %159 = vmatprep.subr.mxu0 0.0
    %160 = vmatpush1.msra.mxu0 0.0
    %161 = vmatprep.subr.mxu0 0.0
    %162 = vmatpush1.msra.mxu0 0.0
    %163 = vmatprep.subr.mxu0 0.0
    %164 = vmatpush1.msra.mxu0 0.0
    %165 = vmatprep.subr.mxu0 0.0
    %166 = vmatpush1.msra.mxu0 0.0
    %167 = vmatprep.subr.mxu0 0.0
    %168 = vmatpush1.msra.mxu0 0.0
    %169 = vmatprep.subr.mxu0 0.0
    %170 = vmatpush1.msra.mxu0 0.0
    %171 = vmatprep.subr.mxu0 0.0
    %172 = vmatpush1.msra.mxu0 0.0
    %173 = vmatprep.subr.mxu0 0.0
    %174 = vmatpush1.msra.mxu0 0.0
    %175 = vmatprep.subr.mxu0 0.0
    %176 = vmatpush1.msra.mxu0 0.0
    %177 = vmatprep.subr.mxu0 0.0
    %178 = vmatpush1.msra.mxu0 0.0
    %179 = vmatprep.subr.mxu0 0.0
    %180 = vmatpush1.msra.mxu0 0.0
    %181 = vmatprep.subr.mxu0 0.0
    %182 = vmatpush1.msra.mxu0 0.0
    %183 = vmatprep.subr.mxu0 0.0
    %184 = vmatpush1.msra.mxu0 0.0
    %185 = vmatprep.subr.mxu0 0.0
    %186 = vmatpush1.msra.mxu0 0.0
    %187 = vmatprep.subr.mxu0 0.0
    %188 = vmatpush1.msra.mxu0 0.0
    %189 = vmatprep.subr.mxu0 0.0
    %190 = vmatpush1.msra.mxu0 0.0
    %191 = vmatprep.subr.mxu0 0.0
    %192 = vmatpush1.msra.mxu0 0.0
    %193 = vmatprep.subr.mxu0 0.0
    %194 = vmatpush1.msra.mxu0 0.0
    %195 = vmatprep.subr.mxu0 0.0
    %196 = vmatpush1.msra.mxu0 0.0
    %197 = vmatprep.subr.mxu0 0.0
    %198 = vmatpush1.msra.mxu0 0.0
    %199 = vmatprep.subr.mxu0 0.0
    %200 = vmatpush1.msra.mxu0 0.0
    %201 = vmatprep.subr.mxu0 0.0
    %202 = vmatpush1.msra.mxu0 0.0
    %203 = vmatprep.subr.mxu0 0.0
    %204 = vmatpush1.msra.mxu0 0.0
    %205 = vmatprep.mubr.f32.mxu0 0.0
    %206 = vmatmul.mubr.f32.gmra.mrb[0].mxu0 %v139
    %v207 = vpop.f32.mrb[0].mxu0
    %v208 = vadd.f32 %v120, %v207
    %v209 = vpop.f32.mrb[0].mxu0
    %v210 = vadd.f32 %v124, %v209
    %211 = vdwg.mxu0
    %212 = vmatprep.subr.mxu0 %v102
    %213 = vmatpush1.msra.mxu0 %v101
    %214 = vmatprep.subr.mxu0 %v106
    %215 = vmatpush1.msra.mxu0 %v105
    %216 = vmatprep.subr.mxu0 %v110
    %217 = vmatpush1.msra.mxu0 %v109
    %218 = vmatprep.subr.mxu0 %v114
    %219 = vmatpush1.msra.mxu0 %v113
    %220 = vmatprep.subr.mxu0 0.0
    %221 = vmatpush1.msra.mxu0 0.0
    %222 = vmatprep.subr.mxu0 0.0
    %223 = vmatpush1.msra.mxu0 0.0
    %224 = vmatprep.subr.mxu0 0.0
    %225 = vmatpush1.msra.mxu0 0.0
    %226 = vmatprep.subr.mxu0 0.0
    %227 = vmatpush1.msra.mxu0 0.0
    %228 = vmatprep.subr.mxu0 0.0
    %229 = vmatpush1.msra.mxu0 0.0
    %230 = vmatprep.subr.mxu0 0.0
    %231 = vmatpush1.msra.mxu0 0.0
    %232 = vmatprep.subr.mxu0 0.0
    %233 = vmatpush1.msra.mxu0 0.0
    %234 = vmatprep.subr.mxu0 0.0
    %235 = vmatpush1.msra.mxu0 0.0
    %236 = vmatprep.subr.mxu0 0.0
    %237 = vmatpush1.msra.mxu0 0.0
    %238 = vmatprep.subr.mxu0 0.0
    %239 = vmatpush1.msra.mxu0 0.0
    %240 = vmatprep.subr.mxu0 0.0
    %241 = vmatpush1.msra.mxu0 0.0
    %242 = vmatprep.subr.mxu0 0.0
    %243 = vmatpush1.msra.mxu0 0.0
    %244 = vmatprep.subr.mxu0 0.0
    %245 = vmatpush1.msra.mxu0 0.0
    %246 = vmatprep.subr.mxu0 0.0
    %247 = vmatpush1.msra.mxu0 0.0
    %248 = vmatprep.subr.mxu0 0.0
    %249 = vmatpush1.msra.mxu0 0.0
    %250 = vmatprep.subr.mxu0 0.0
    %251 = vmatpush1.msra.mxu0 0.0
    %252 = vmatprep.subr.mxu0 0.0
    %253 = vmatpush1.msra.mxu0 0.0
    %254 = vmatprep.subr.mxu0 0.0
    %255 = vmatpush1.msra.mxu0 0.0
    %256 = vmatprep.subr.mxu0 0.0
    %257 = vmatpush1.msra.mxu0 0.0
    %258 = vmatprep.subr.mxu0 0.0
    %259 = vmatpush1.msra.mxu0 0.0
    %260 = vmatprep.subr.mxu0 0.0
    %261 = vmatpush1.msra.mxu0 0.0
    %262 = vmatprep.subr.mxu0 0.0
    %263 = vmatpush1.msra.mxu0 0.0
    %264 = vmatprep.subr.mxu0 0.0
    %265 = vmatpush1.msra.mxu0 0.0
    %266 = vmatprep.subr.mxu0 0.0
    %267 = vmatpush1.msra.mxu0 0.0
    %268 = vmatprep.subr.mxu0 0.0
    %269 = vmatpush1.msra.mxu0 0.0
    %270 = vmatprep.subr.mxu0 0.0
    %271 = vmatpush1.msra.mxu0 0.0
    %272 = vmatprep.subr.mxu0 0.0
    %273 = vmatpush1.msra.mxu0 0.0
    %274 = vmatprep.subr.mxu0 0.0
    %275 = vmatpush1.msra.mxu0 0.0
    %276 = vmatprep.mubr.f32.mxu0 0.0
    %277 = vmatmul.mubr.f32.gmra.mrb[0].mxu0 %v139
    %v278 = vpop.f32.mrb[0].mxu0
    %v279 = vadd.f32 %v128, %v278
    %v280 = vpop.f32.mrb[0].mxu0
    %v281 = vadd.f32 %v132, %v280
    %282 = vdwg.mxu0
    %v283 = vmax.f32 %v208, 0.0
    %v284 = vmax.f32 %v210, 0.0
    %v285 = vmax.f32 %v279, 0.0
    %v286 = vmax.f32 %v281, 0.0
    %v287 = vld [vmem:[#allocation6] sm:$0xff]
    %v288 = vld [vmem:[#allocation6 + $0x8] sm:$0xff]
    %v289 = vld [vmem:[#allocation6 + $0x10] sm:$0xff]
    %v290 = vld [vmem:[#allocation6 + $0x18] sm:$0xff]
    %v291 = vld [vmem:[#allocation6 + $0x20] sm:$0xff]
    %v292 = vld [vmem:[#allocation6 + $0x28] sm:$0xff]
    %v293 = vld [vmem:[#allocation6 + $0x30] sm:$0xff]
    %v294 = vld [vmem:[#allocation6 + $0x38] sm:$0xff]
    %v295 = vld [vmem:[#allocation6 + $0x40] sm:$0xff]
    %v296 = vld [vmem:[#allocation6 + $0x48] sm:$0xff]
    %v297 = vld [vmem:[#allocation6 + $0x50] sm:$0xff]
    %v298 = vld [vmem:[#allocation6 + $0x58] sm:$0xff]
    %v299 = vld [vmem:[#allocation6 + $0x60] sm:$0xff]
    %v300 = vld [vmem:[#allocation6 + $0x68] sm:$0xff]
    %v301 = vld [vmem:[#allocation6 + $0x70] sm:$0xff]
    %v302 = vld [vmem:[#allocation6 + $0x78] sm:$0xff]
    %v303 = vld [vmem:[#allocation6 + $0x80] sm:$0xff]
    %v304 = vld [vmem:[#allocation6 + $0x88] sm:$0xff]
    %v305 = vld [vmem:[#allocation6 + $0x90] sm:$0xff]
    %v306 = vld [vmem:[#allocation6 + $0x98] sm:$0xff]
    %v307 = vld [vmem:[#allocation6 + $0xa0] sm:$0xff]
    %v308 = vld [vmem:[#allocation6 + $0xa8] sm:$0xff]
    %v309 = vld [vmem:[#allocation6 + $0xb0] sm:$0xff]
    %v310 = vld [vmem:[#allocation6 + $0xb8] sm:$0xff]
    %v311 = vld [vmem:[#allocation6 + $0xc0] sm:$0xff]
    %v312 = vld [vmem:[#allocation6 + $0xc8] sm:$0xff]
    %v313 = vld [vmem:[#allocation6 + $0xd0] sm:$0xff]
    %v314 = vld [vmem:[#allocation6 + $0xd8] sm:$0xff]
    %v315 = vld [vmem:[#allocation6 + $0xe0] sm:$0xff]
    %v316 = vld [vmem:[#allocation6 + $0xe8] sm:$0xff]
    %v317 = vld [vmem:[#allocation6 + $0xf0] sm:$0xff]
    %v318 = vld [vmem:[#allocation6 + $0xf8] sm:$0xff]
    %v319 = vld [vmem:[#allocation6 + $0x100] sm:$0xff]
    %v320 = vld [vmem:[#allocation6 + $0x108] sm:$0xff]
    %v321 = vld [vmem:[#allocation6 + $0x110] sm:$0xff]
    %v322 = vld [vmem:[#allocation6 + $0x118] sm:$0xff]
    %v323 = vld [vmem:[#allocation6 + $0x120] sm:$0xff]
    %v324 = vld [vmem:[#allocation6 + $0x128] sm:$0xff]
    %v325 = vld [vmem:[#allocation6 + $0x130] sm:$0xff]
    %v326 = vld [vmem:[#allocation6 + $0x138] sm:$0xff]
    %v327 = vld [vmem:[#allocation6 + $0x140] sm:$0xff]
    %v328 = vld [vmem:[#allocation6 + $0x148] sm:$0xff]
    %v329 = vld [vmem:[#allocation6 + $0x150] sm:$0xff]
    %v330 = vld [vmem:[#allocation6 + $0x158] sm:$0xff]
    %v331 = vld [vmem:[#allocation6 + $0x160] sm:$0xff]
    %v332 = vld [vmem:[#allocation6 + $0x168] sm:$0xff]
    %v333 = vld [vmem:[#allocation6 + $0x170] sm:$0xff]
    %v334 = vld [vmem:[#allocation6 + $0x178] sm:$0xff]
    %v335 = vld [vmem:[#allocation6 + $0x180] sm:$0xff]
    %v336 = vld [vmem:[#allocation6 + $0x188] sm:$0xff]
    %v337 = vld [vmem:[#allocation6 + $0x190] sm:$0xff]
    %v338 = vld [vmem:[#allocation6 + $0x198] sm:$0xff]
    %v339 = vld [vmem:[#allocation6 + $0x1a0] sm:$0xff]
    %v340 = vld [vmem:[#allocation6 + $0x1a8] sm:$0xff]
    %v341 = vld [vmem:[#allocation6 + $0x1b0] sm:$0xff]
    %v342 = vld [vmem:[#allocation6 + $0x1b8] sm:$0xff]
    %v343 = vld [vmem:[#allocation6 + $0x1c0] sm:$0xff]
    %v344 = vld [vmem:[#allocation6 + $0x1c8] sm:$0xff]
    %v345 = vld [vmem:[#allocation6 + $0x1d0] sm:$0xff]
    %v346 = vld [vmem:[#allocation6 + $0x1d8] sm:$0xff]
    %v347 = vld [vmem:[#allocation6 + $0x1e0] sm:$0xff]
    %v348 = vld [vmem:[#allocation6 + $0x1e8] sm:$0xff]
    %v349 = vld [vmem:[#allocation6 + $0x1f0] sm:$0xff]
    %v350 = vld [vmem:[#allocation6 + $0x1f8] sm:$0xff]
    %v351 = vld [vmem:[#allocation6 + $0x200] sm:$0xff]
    %v352 = vld [vmem:[#allocation6 + $0x208] sm:$0xff]
    %v353 = vld [vmem:[#allocation6 + $0x210] sm:$0xff]
    %v354 = vld [vmem:[#allocation6 + $0x218] sm:$0xff]
    %v355 = vld [vmem:[#allocation6 + $0x220] sm:$0xff]
    %v356 = vld [vmem:[#allocation6 + $0x228] sm:$0xff]
    %v357 = vld [vmem:[#allocation6 + $0x230] sm:$0xff]
    %v358 = vld [vmem:[#allocation6 + $0x238] sm:$0xff]
    %v359 = vld [vmem:[#allocation6 + $0x240] sm:$0xff]
    %v360 = vld [vmem:[#allocation6 + $0x248] sm:$0xff]
    %v361 = vld [vmem:[#allocation6 + $0x250] sm:$0xff]
    %v362 = vld [vmem:[#allocation6 + $0x258] sm:$0xff]
    %v363 = vld [vmem:[#allocation6 + $0x260] sm:$0xff]
    %v364 = vld [vmem:[#allocation6 + $0x268] sm:$0xff]
    %v365 = vld [vmem:[#allocation6 + $0x270] sm:$0xff]
    %v366 = vld [vmem:[#allocation6 + $0x278] sm:$0xff]
    %v367 = vld [vmem:[#allocation6 + $0x280] sm:$0xff]
    %v368 = vld [vmem:[#allocation6 + $0x288] sm:$0xff]
    %v369 = vld [vmem:[#allocation6 + $0x290] sm:$0xff]
    %v370 = vld [vmem:[#allocation6 + $0x298] sm:$0xff]
    %v371 = vld [vmem:[#allocation6 + $0x2a0] sm:$0xff]
    %v372 = vld [vmem:[#allocation6 + $0x2a8] sm:$0xff]
    %v373 = vld [vmem:[#allocation6 + $0x2b0] sm:$0xff]
    %v374 = vld [vmem:[#allocation6 + $0x2b8] sm:$0xff]
    %v375 = vld [vmem:[#allocation6 + $0x2c0] sm:$0xff]
    %v376 = vld [vmem:[#allocation6 + $0x2c8] sm:$0xff]
    %v377 = vld [vmem:[#allocation6 + $0x2d0] sm:$0xff]
    %v378 = vld [vmem:[#allocation6 + $0x2d8] sm:$0xff]
    %v379 = vld [vmem:[#allocation6 + $0x2e0] sm:$0xff]
    %v380 = vld [vmem:[#allocation6 + $0x2e8] sm:$0xff]
    %v381 = vld [vmem:[#allocation6 + $0x2f0] sm:$0xff]
    %v382 = vld [vmem:[#allocation6 + $0x2f8] sm:$0xff]
    %v383 = vld [vmem:[#allocation6 + $0x300] sm:$0xff]
    %v384 = vld [vmem:[#allocation6 + $0x308] sm:$0xff]
    %v385 = vld [vmem:[#allocation6 + $0x310] sm:$0xff]
    %v386 = vld [vmem:[#allocation6 + $0x318] sm:$0xff]
    %v387 = vld [vmem:[#allocation6 + $0x320] sm:$0xff]
    %v388 = vld [vmem:[#allocation6 + $0x328] sm:$0xff]
    %v389 = vld [vmem:[#allocation6 + $0x330] sm:$0xff]
    %v390 = vld [vmem:[#allocation6 + $0x338] sm:$0xff]
    %v391 = vld [vmem:[#allocation6 + $0x340] sm:$0xff]
    %v392 = vld [vmem:[#allocation6 + $0x348] sm:$0xff]
    %v393 = vld [vmem:[#allocation6 + $0x350] sm:$0xff]
    %v394 = vld [vmem:[#allocation6 + $0x358] sm:$0xff]
    %v395 = vld [vmem:[#allocation6 + $0x360] sm:$0xff]
    %v396 = vld [vmem:[#allocation6 + $0x368] sm:$0xff]
    %v397 = vld [vmem:[#allocation6 + $0x370] sm:$0xff]
    %v398 = vld [vmem:[#allocation6 + $0x378] sm:$0xff]
    %v399 = vld [vmem:[#allocation6 + $0x380] sm:$0xff]
    %v400 = vld [vmem:[#allocation6 + $0x388] sm:$0xff]
    %v401 = vld [vmem:[#allocation6 + $0x390] sm:$0xff]
    %v402 = vld [vmem:[#allocation6 + $0x398] sm:$0xff]
    %v403 = vld [vmem:[#allocation6 + $0x3a0] sm:$0xff]
    %v404 = vld [vmem:[#allocation6 + $0x3a8] sm:$0xff]
    %v405 = vld [vmem:[#allocation6 + $0x3b0] sm:$0xff]
    %v406 = vld [vmem:[#allocation6 + $0x3b8] sm:$0xff]
    %v407 = vld [vmem:[#allocation6 + $0x3c0] sm:$0xff]
    %v408 = vld [vmem:[#allocation6 + $0x3c8] sm:$0xff]
    %v409 = vld [vmem:[#allocation6 + $0x3d0] sm:$0xff]
    %v410 = vld [vmem:[#allocation6 + $0x3d8] sm:$0xff]
    %v411 = vld [vmem:[#allocation6 + $0x3e0] sm:$0xff]
    %v412 = vld [vmem:[#allocation6 + $0x3e8] sm:$0xff]
    %v413 = vld [vmem:[#allocation6 + $0x3f0] sm:$0xff]
    %v414 = vld [vmem:[#allocation6 + $0x3f8] sm:$0xff]
    %v415 = vld [vmem:[%s4] sm:$0x3]
    %v417 = vlaneseq
    %v418 = vshrl.u32 %v417, 7
    %v419 = vsub.s32 0, %v418
    %v420 = vrot.slane %v415, %v419
    %v421 = vlaneseq
    %v422 = vshrl.u32 %v421, 7
    %v423 = vsub.s32 1, %v422
    %v424 = vrot.slane %v415, %v423
    %427 = vmatprep.subr.mxu0 %v288
    %428 = vmatpush1.msra.mxu0 %v287
    %429 = vmatprep.subr.mxu0 %v290
    %430 = vmatpush1.msra.mxu0 %v289
    %431 = vmatprep.subr.mxu0 %v292
    %432 = vmatpush1.msra.mxu0 %v291
    %433 = vmatprep.subr.mxu0 %v294
    %434 = vmatpush1.msra.mxu0 %v293
    %435 = vmatprep.subr.mxu0 %v296
    %436 = vmatpush1.msra.mxu0 %v295
    %437 = vmatprep.subr.mxu0 %v298
    %438 = vmatpush1.msra.mxu0 %v297
    %439 = vmatprep.subr.mxu0 %v300
    %440 = vmatpush1.msra.mxu0 %v299
    %441 = vmatprep.subr.mxu0 %v302
    %442 = vmatpush1.msra.mxu0 %v301
    %443 = vmatprep.subr.mxu0 %v304
    %444 = vmatpush1.msra.mxu0 %v303
    %445 = vmatprep.subr.mxu0 %v306
    %446 = vmatpush1.msra.mxu0 %v305
    %447 = vmatprep.subr.mxu0 %v308
    %448 = vmatpush1.msra.mxu0 %v307
    %449 = vmatprep.subr.mxu0 %v310
    %450 = vmatpush1.msra.mxu0 %v309
    %451 = vmatprep.subr.mxu0 %v312
    %452 = vmatpush1.msra.mxu0 %v311
    %453 = vmatprep.subr.mxu0 %v314
    %454 = vmatpush1.msra.mxu0 %v313
    %455 = vmatprep.subr.mxu0 %v316
    %456 = vmatpush1.msra.mxu0 %v315
    %457 = vmatprep.subr.mxu0 %v318
    %458 = vmatpush1.msra.mxu0 %v317
    %459 = vmatprep.subr.mxu0 %v320
    %460 = vmatpush1.msra.mxu0 %v319
    %461 = vmatprep.subr.mxu0 %v322
    %462 = vmatpush1.msra.mxu0 %v321
    %463 = vmatprep.subr.mxu0 %v324
    %464 = vmatpush1.msra.mxu0 %v323
    %465 = vmatprep.subr.mxu0 %v326
    %466 = vmatpush1.msra.mxu0 %v325
    %467 = vmatprep.subr.mxu0 %v328
    %468 = vmatpush1.msra.mxu0 %v327
    %469 = vmatprep.subr.mxu0 %v330
    %470 = vmatpush1.msra.mxu0 %v329
    %471 = vmatprep.subr.mxu0 %v332
    %472 = vmatpush1.msra.mxu0 %v331
    %473 = vmatprep.subr.mxu0 %v334
    %474 = vmatpush1.msra.mxu0 %v333
    %475 = vmatprep.subr.mxu0 %v336
    %476 = vmatpush1.msra.mxu0 %v335
    %477 = vmatprep.subr.mxu0 %v338
    %478 = vmatpush1.msra.mxu0 %v337
    %479 = vmatprep.subr.mxu0 %v340
    %480 = vmatpush1.msra.mxu0 %v339
    %481 = vmatprep.subr.mxu0 %v342
    %482 = vmatpush1.msra.mxu0 %v341
    %483 = vmatprep.subr.mxu0 %v344
    %484 = vmatpush1.msra.mxu0 %v343
    %485 = vmatprep.subr.mxu0 %v346
    %486 = vmatpush1.msra.mxu0 %v345
    %487 = vmatprep.subr.mxu0 %v348
    %488 = vmatpush1.msra.mxu0 %v347
    %489 = vmatprep.subr.mxu0 %v350
    %490 = vmatpush1.msra.mxu0 %v349
    %491 = vmatprep.mubr.f32.mxu0 %v284
    %492 = vmatmul.mubr.f32.gmra.mrb[0].mxu0 %v283
    %v493 = vpop.f32.mrb[0].mxu0
    %v494 = vadd.f32 %v420, %v493
    %v495 = vpop.f32.mrb[0].mxu0
    %v496 = vadd.f32 %v424, %v495
    %497 = vdwg.mxu0
    %498 = vmatprep.subr.mxu0 %v352
    %499 = vmatpush1.msra.mxu0 %v351
    %500 = vmatprep.subr.mxu0 %v354
    %501 = vmatpush1.msra.mxu0 %v353
    %502 = vmatprep.subr.mxu0 %v356
    %503 = vmatpush1.msra.mxu0 %v355
    %504 = vmatprep.subr.mxu0 %v358
    %505 = vmatpush1.msra.mxu0 %v357
    %506 = vmatprep.subr.mxu0 %v360
    %507 = vmatpush1.msra.mxu0 %v359
    %508 = vmatprep.subr.mxu0 %v362
    %509 = vmatpush1.msra.mxu0 %v361
    %510 = vmatprep.subr.mxu0 %v364
    %511 = vmatpush1.msra.mxu0 %v363
    %512 = vmatprep.subr.mxu0 %v366
    %513 = vmatpush1.msra.mxu0 %v365
    %514 = vmatprep.subr.mxu0 %v368
    %515 = vmatpush1.msra.mxu0 %v367
    %516 = vmatprep.subr.mxu0 %v370
    %517 = vmatpush1.msra.mxu0 %v369
    %518 = vmatprep.subr.mxu0 %v372
    %519 = vmatpush1.msra.mxu0 %v371
    %520 = vmatprep.subr.mxu0 %v374
    %521 = vmatpush1.msra.mxu0 %v373
    %522 = vmatprep.subr.mxu0 %v376
    %523 = vmatpush1.msra.mxu0 %v375
    %524 = vmatprep.subr.mxu0 %v378
    %525 = vmatpush1.msra.mxu0 %v377
    %526 = vmatprep.subr.mxu0 %v380
    %527 = vmatpush1.msra.mxu0 %v379
    %528 = vmatprep.subr.mxu0 %v382
    %529 = vmatpush1.msra.mxu0 %v381
    %530 = vmatprep.subr.mxu0 %v384
    %531 = vmatpush1.msra.mxu0 %v383
    %532 = vmatprep.subr.mxu0 %v386
    %533 = vmatpush1.msra.mxu0 %v385
    %534 = vmatprep.subr.mxu0 %v388
    %535 = vmatpush1.msra.mxu0 %v387
    %536 = vmatprep.subr.mxu0 %v390
    %537 = vmatpush1.msra.mxu0 %v389
    %538 = vmatprep.subr.mxu0 %v392
    %539 = vmatpush1.msra.mxu0 %v391
    %540 = vmatprep.subr.mxu0 %v394
    %541 = vmatpush1.msra.mxu0 %v393
    %542 = vmatprep.subr.mxu0 %v396
    %543 = vmatpush1.msra.mxu0 %v395
    %544 = vmatprep.subr.mxu0 %v398
    %545 = vmatpush1.msra.mxu0 %v397
    %546 = vmatprep.subr.mxu0 %v400
    %547 = vmatpush1.msra.mxu0 %v399
    %548 = vmatprep.subr.mxu0 %v402
    %549 = vmatpush1.msra.mxu0 %v401
    %550 = vmatprep.subr.mxu0 %v404
    %551 = vmatpush1.msra.mxu0 %v403
    %552 = vmatprep.subr.mxu0 %v406
    %553 = vmatpush1.msra.mxu0 %v405
    %554 = vmatprep.subr.mxu0 %v408
    %555 = vmatpush1.msra.mxu0 %v407
    %556 = vmatprep.subr.mxu0 %v410
    %557 = vmatpush1.msra.mxu0 %v409
    %558 = vmatprep.subr.mxu0 %v412
    %559 = vmatpush1.msra.mxu0 %v411
    %560 = vmatprep.subr.mxu0 %v414
    %561 = vmatpush1.msra.mxu0 %v413
    %562 = vmatprep.mubr.f32.mxu0 %v286
    %563 = vmatmul.mubr.f32.gmra.mrb[0].mxu0 %v285
    %v564 = vpop.f32.mrb[0].mxu0
    %v565 = vadd.f32 %v494, %v564
    %v566 = vpop.f32.mrb[0].mxu0
    %v567 = vadd.f32 %v496, %v566
    %568 = vdwg.mxu0
    %v569 = vmax.f32 %v565, 0.0
    %v570 = vmax.f32 %v567, 0.0
    %v571 = vld [vmem:[#allocation7] sm:$0xff]
    %v572 = vld [vmem:[#allocation7 + $0x8] sm:$0xff]
    %v573 = vld [vmem:[#allocation7 + $0x10] sm:$0xff]
    %v574 = vld [vmem:[#allocation7 + $0x18] sm:$0xff]
    %v575 = vld [vmem:[#allocation7 + $0x20] sm:$0xff]
    %v576 = vld [vmem:[#allocation7 + $0x28] sm:$0xff]
    %v577 = vld [vmem:[#allocation7 + $0x30] sm:$0xff]
    %v578 = vld [vmem:[#allocation7 + $0x38] sm:$0xff]
    %v579 = vld [vmem:[#allocation7 + $0x40] sm:$0xff]
    %v580 = vld [vmem:[#allocation7 + $0x48] sm:$0xff]
    %v581 = vld [vmem:[#allocation7 + $0x50] sm:$0xff]
    %v582 = vld [vmem:[#allocation7 + $0x58] sm:$0xff]
    %v583 = vld [vmem:[#allocation7 + $0x60] sm:$0xff]
    %v584 = vld [vmem:[#allocation7 + $0x68] sm:$0xff]
    %v585 = vld [vmem:[#allocation7 + $0x70] sm:$0xff]
    %v586 = vld [vmem:[#allocation7 + $0x78] sm:$0xff]
    %v587 = vld [vmem:[#allocation7 + $0x80] sm:$0xff]
    %v588 = vld [vmem:[#allocation7 + $0x88] sm:$0xff]
    %v589 = vld [vmem:[#allocation7 + $0x90] sm:$0xff]
    %v590 = vld [vmem:[#allocation7 + $0x98] sm:$0xff]
    %v591 = vld [vmem:[#allocation7 + $0xa0] sm:$0xff]
    %v592 = vld [vmem:[#allocation7 + $0xa8] sm:$0xff]
    %v593 = vld [vmem:[#allocation7 + $0xb0] sm:$0xff]
    %v594 = vld [vmem:[#allocation7 + $0xb8] sm:$0xff]
    %v595 = vld [vmem:[#allocation7 + $0xc0] sm:$0xff]
    %v596 = vld [vmem:[#allocation7 + $0xc8] sm:$0xff]
    %v597 = vld [vmem:[#allocation7 + $0xd0] sm:$0xff]
    %v598 = vld [vmem:[#allocation7 + $0xd8] sm:$0xff]
    %v599 = vld [vmem:[#allocation7 + $0xe0] sm:$0xff]
    %v600 = vld [vmem:[#allocation7 + $0xe8] sm:$0xff]
    %v601 = vld [vmem:[#allocation7 + $0xf0] sm:$0xff]
    %v602 = vld [vmem:[#allocation7 + $0xf8] sm:$0xff]
    %v603 = vld [vmem:[%s6] sm:$0x1]
    %v605 = vlaneseq
    %v606 = vshrl.u32 %v605, 7
    %v607 = vsub.s32 0, %v606
    %v608 = vrot.slane %v603, %v607
    %610 = vmatprep.subr.mxu0 0.0
    %611 = vmatpush1.msra.mxu0 %v571
    %612 = vmatprep.subr.mxu0 0.0
    %613 = vmatpush1.msra.mxu0 %v572
    %614 = vmatprep.subr.mxu0 0.0
    %615 = vmatpush1.msra.mxu0 %v573
    %616 = vmatprep.subr.mxu0 0.0
    %617 = vmatpush1.msra.mxu0 %v574
    %618 = vmatprep.subr.mxu0 0.0
    %619 = vmatpush1.msra.mxu0 %v575
    %620 = vmatprep.subr.mxu0 0.0
    %621 = vmatpush1.msra.mxu0 %v576
    %622 = vmatprep.subr.mxu0 0.0
    %623 = vmatpush1.msra.mxu0 %v577
    %624 = vmatprep.subr.mxu0 0.0
    %625 = vmatpush1.msra.mxu0 %v578
    %626 = vmatprep.subr.mxu0 0.0
    %627 = vmatpush1.msra.mxu0 %v579
    %628 = vmatprep.subr.mxu0 0.0
    %629 = vmatpush1.msra.mxu0 %v580
    %630 = vmatprep.subr.mxu0 0.0
    %631 = vmatpush1.msra.mxu0 %v581
    %632 = vmatprep.subr.mxu0 0.0
    %633 = vmatpush1.msra.mxu0 %v582
    %634 = vmatprep.subr.mxu0 0.0
    %635 = vmatpush1.msra.mxu0 %v583
    %636 = vmatprep.subr.mxu0 0.0
    %637 = vmatpush1.msra.mxu0 %v584
    %638 = vmatprep.subr.mxu0 0.0
    %639 = vmatpush1.msra.mxu0 %v585
    %640 = vmatprep.subr.mxu0 0.0
    %641 = vmatpush1.msra.mxu0 %v586
    %642 = vmatprep.subr.mxu0 0.0
    %643 = vmatpush1.msra.mxu0 %v587
    %644 = vmatprep.subr.mxu0 0.0
    %645 = vmatpush1.msra.mxu0 %v588
    %646 = vmatprep.subr.mxu0 0.0
    %647 = vmatpush1.msra.mxu0 %v589
    %648 = vmatprep.subr.mxu0 0.0
    %649 = vmatpush1.msra.mxu0 %v590
    %650 = vmatprep.subr.mxu0 0.0
    %651 = vmatpush1.msra.mxu0 %v591
    %652 = vmatprep.subr.mxu0 0.0
    %653 = vmatpush1.msra.mxu0 %v592
    %654 = vmatprep.subr.mxu0 0.0
    %655 = vmatpush1.msra.mxu0 %v593
    %656 = vmatprep.subr.mxu0 0.0
    %657 = vmatpush1.msra.mxu0 %v594
    %658 = vmatprep.subr.mxu0 0.0
    %659 = vmatpush1.msra.mxu0 %v595
    %660 = vmatprep.subr.mxu0 0.0
    %661 = vmatpush1.msra.mxu0 %v596
    %662 = vmatprep.subr.mxu0 0.0
    %663 = vmatpush1.msra.mxu0 %v597
    %664 = vmatprep.subr.mxu0 0.0
    %665 = vmatpush1.msra.mxu0 %v598
    %666 = vmatprep.subr.mxu0 0.0
    %667 = vmatpush1.msra.mxu0 %v599
    %668 = vmatprep.subr.mxu0 0.0
    %669 = vmatpush1.msra.mxu0 %v600
    %670 = vmatprep.subr.mxu0 0.0
    %671 = vmatpush1.msra.mxu0 %v601
    %672 = vmatprep.subr.mxu0 0.0
    %673 = vmatpush1.msra.mxu0 %v602
    %674 = vmatprep.mubr.f32.mxu0 %v570
    %675 = vmatmul.mubr.f32.gmra.mrb[0].mxu0 %v569
    %v676 = vpop.f32.mrb[0].mxu0
    %v677 = vadd.f32 %v608, %v676
    %v678 = vpop.f32.mrb[0].mxu0
    %679 = vdwg.mxu0
    %v680 = vmax.f32 %v677, 0.0
    %v681 = vld [vmem:[#allocation9] sm:$0xff]
    %v682 = vld [vmem:[#allocation9 + $0x8] sm:$0xff]
    %v683 = vld [vmem:[#allocation9 + $0x10] sm:$0xff]
    %v684 = vld [vmem:[#allocation9 + $0x18] sm:$0xff]
    %v685 = vld [vmem:[#allocation9 + $0x20] sm:$0xff]
    %v686 = vld [vmem:[#allocation9 + $0x28] sm:$0xff]
    %v687 = vld [vmem:[#allocation9 + $0x30] sm:$0xff]
    %v688 = vld [vmem:[#allocation9 + $0x38] sm:$0xff]
    %v689 = vld [vmem:[#allocation9 + $0x40] sm:$0xff]
    %v690 = vld [vmem:[#allocation9 + $0x48] sm:$0xff]
    %v691 = vld [vmem:[#allocation9 + $0x50] sm:$0xff]
    %v692 = vld [vmem:[#allocation9 + $0x58] sm:$0xff]
    %v693 = vld [vmem:[#allocation9 + $0x60] sm:$0xff]
    %v694 = vld [vmem:[#allocation9 + $0x68] sm:$0xff]
    %v695 = vld [vmem:[#allocation9 + $0x70] sm:$0xff]
    %v696 = vld [vmem:[#allocation9 + $0x78] sm:$0xff]
    %v697 = vld [vmem:[%s8] sm:$0x1]
    %v699 = vlaneseq
    %v700 = vshrl.u32 %v699, 7
    %v701 = vsub.s32 0, %v700
    %v702 = vrot.slane %v697, %v701
    %704 = vmatprep.subr.mxu0 0.0
    %705 = vmatpush1.msra.mxu0 %v681
    %706 = vmatprep.subr.mxu0 0.0
    %707 = vmatpush1.msra.mxu0 %v682
    %708 = vmatprep.subr.mxu0 0.0
    %709 = vmatpush1.msra.mxu0 %v683
    %710 = vmatprep.subr.mxu0 0.0
    %711 = vmatpush1.msra.mxu0 %v684
    %712 = vmatprep.subr.mxu0 0.0
    %713 = vmatpush1.msra.mxu0 %v685
    %714 = vmatprep.subr.mxu0 0.0
    %715 = vmatpush1.msra.mxu0 %v686
    %716 = vmatprep.subr.mxu0 0.0
    %717 = vmatpush1.msra.mxu0 %v687
    %718 = vmatprep.subr.mxu0 0.0
    %719 = vmatpush1.msra.mxu0 %v688
    %720 = vmatprep.subr.mxu0 0.0
    %721 = vmatpush1.msra.mxu0 %v689
    %722 = vmatprep.subr.mxu0 0.0
    %723 = vmatpush1.msra.mxu0 %v690
    %724 = vmatprep.subr.mxu0 0.0
    %725 = vmatpush1.msra.mxu0 %v691
    %726 = vmatprep.subr.mxu0 0.0
    %727 = vmatpush1.msra.mxu0 %v692
    %728 = vmatprep.subr.mxu0 0.0
    %729 = vmatpush1.msra.mxu0 %v693
    %730 = vmatprep.subr.mxu0 0.0
    %731 = vmatpush1.msra.mxu0 %v694
    %732 = vmatprep.subr.mxu0 0.0
    %733 = vmatpush1.msra.mxu0 %v695
    %734 = vmatprep.subr.mxu0 0.0
    %735 = vmatpush1.msra.mxu0 %v696
    %736 = vmatprep.subr.mxu0 0.0
    %737 = vmatpush1.msra.mxu0 0.0
    %738 = vmatprep.subr.mxu0 0.0
    %739 = vmatpush1.msra.mxu0 0.0
    %740 = vmatprep.subr.mxu0 0.0
    %741 = vmatpush1.msra.mxu0 0.0
    %742 = vmatprep.subr.mxu0 0.0
    %743 = vmatpush1.msra.mxu0 0.0
    %744 = vmatprep.subr.mxu0 0.0
    %745 = vmatpush1.msra.mxu0 0.0
    %746 = vmatprep.subr.mxu0 0.0
    %747 = vmatpush1.msra.mxu0 0.0
    %748 = vmatprep.subr.mxu0 0.0
    %749 = vmatpush1.msra.mxu0 0.0
    %750 = vmatprep.subr.mxu0 0.0
    %751 = vmatpush1.msra.mxu0 0.0
    %752 = vmatprep.subr.mxu0 0.0
    %753 = vmatpush1.msra.mxu0 0.0
    %754 = vmatprep.subr.mxu0 0.0
    %755 = vmatpush1.msra.mxu0 0.0
    %756 = vmatprep.subr.mxu0 0.0
    %757 = vmatpush1.msra.mxu0 0.0
    %758 = vmatprep.subr.mxu0 0.0
    %759 = vmatpush1.msra.mxu0 0.0
    %760 = vmatprep.subr.mxu0 0.0
    %761 = vmatpush1.msra.mxu0 0.0
    %762 = vmatprep.subr.mxu0 0.0
    %763 = vmatpush1.msra.mxu0 0.0
    %764 = vmatprep.subr.mxu0 0.0
    %765 = vmatpush1.msra.mxu0 0.0
    %766 = vmatprep.subr.mxu0 0.0
    %767 = vmatpush1.msra.mxu0 0.0
    %768 = vmatprep.mubr.f32.mxu0 0.0
    %769 = vmatmul.mubr.f32.gmra.mrb[0].mxu0 %v680
    %v770 = vpop.f32.mrb[0].mxu0
    %v771 = vadd.f32 %v702, %v770
    %v772 = vpop.f32.mrb[0].mxu0
    %773 = vdwg.mxu0
    %vm774 = vcmask 15360
    %775 = vst.msk [vmem:[%s9] sm:$0xff] %vm774, %v771
    // Predicated region
    $region58: #{tpu_custom_call.1} parent=1 // pred_check
      _
    $region59: #{tpu_custom_call.1} parent=1 // pred_check_branch
      %777 = sbr.rel (0) target = $region61
    $region60: #{tpu_custom_call.1} parent=1 // pred_region
      _
    $region61: #{tpu_custom_call.1} parent=1 // pred_fallthru
      _
    // Predicated region
    $region62: #{tpu_custom_call.1} parent=1 // pred_check
      _
    $region63: #{tpu_custom_call.1} parent=1 // pred_check_branch
      %779 = sbr.rel (0) target = $region65
    $region64: #{tpu_custom_call.1} parent=1 // pred_region
      _
    $region65: #{tpu_custom_call.1} parent=1 // pred_fallthru
      _
    %780 = vsyncpa [#allocation3], 1
    %781 = vsyncpa [#allocation5], 1
    %782 = vsyncpa [#allocation8], 1

</llo_original>
